<compile_context>
chip_gen: v7x
topology: tpu7x:2x2x1
jax: 0.10.0
libtpu: 0.0.40
codegen_flags: <defaults>
</compile_context>

<pallas_src>
import numpy as np
import jax
import jax.numpy as jnp
from jax.experimental import pallas as pl
from jax.experimental.pallas import tpu as pltpu


# ---------------------------------------------------------------------------
# Fused kernel: build normalized dictionary in registers + tiled matmul.
# ---------------------------------------------------------------------------
def _make_kernel(Ttot):
    def decoder_kernel(rr_ref, th_ref, x_ref, o_ref):
        """rr_ref/th_ref: (1, N) f32; x_ref: (K, tn); o_ref: (Ttot, tn) f32."""
        K, _ = x_ref.shape
        N = rr_ref.shape[1]
        rr = rr_ref[...]                                       # (1, N)
        th = th_ref[...]                                       # (1, N)

        # ---- normalized DYAN dictionary, recomputed per step (tiny) -------
        ii_i = jax.lax.broadcasted_iota(jnp.int32, (Ttot, N), 0)
        ii = ii_i.astype(jnp.float32)
        odd = (ii_i % 2) == 1

        base = jnp.abs(rr)
        # torch.pow semantics incl. 0**0 == 1
        abs_pow = jnp.where(jnp.logical_and(base == 0.0, ii == 0.0),
                            1.0, base ** ii)                   # |rr|^i
        sgn = jnp.where(jnp.logical_and(rr < 0.0, odd), -1.0, 1.0)
        rr_pow = sgn * abs_pow                                  # rr^i
        neg_pow = jnp.where(odd, -rr_pow, rr_pow)               # (-rr)^i

        cos_it = jnp.cos(ii * th)
        sin_it = jnp.sin(ii * th)

        ones = jnp.ones((Ttot, 1), jnp.float32)
        dic = jnp.concatenate(
            [ones, rr_pow * cos_it, neg_pow * cos_it,
             rr_pow * sin_it, neg_pow * sin_it], axis=1)        # (Ttot, K)

        G = jnp.sqrt(jnp.sum(dic * dic, axis=0, keepdims=True))  # (1, K)
        G = jnp.where(G == 0.0, jnp.sqrt(jnp.float32(Ttot)), G)
        dic = dic / G                                            # f32

        # ---- contraction: MXU over first K-1 rows (aligned), rank-1 VPU ---
        # ---- add for the peeled last row.                                ---
        Km = K - 1
        x_main = x_ref[pl.ds(0, Km), :]                          # (Km, tn)
        x_last = x_ref[pl.ds(Km, 1), :]                          # (1,  tn)

        acc = jnp.dot(dic[:, :Km].astype(x_main.dtype), x_main,
                      preferred_element_type=jnp.float32)        # (Ttot, tn)
        acc = acc + dic[:, Km:] * x_last.astype(jnp.float32)     # rank-1 bcast
        o_ref[...] = acc.astype(o_ref.dtype)

    return decoder_kernel


def _pick_lane_tile(d, min_steps=1):
    """Largest lane tile (multiple of 128) dividing d with >= min_steps steps."""
    for tn in (8192, 4096, 2048, 1024, 512, 256, 128):
        if d % tn == 0 and d // tn >= min_steps:
            return tn
    return 128


# ---------------------------------------------------------------------------
# Direct path: D is a multiple of 128 -> no wrapper transposes at all.
# ---------------------------------------------------------------------------
def _forward_direct(rr_row, th_row, x, Ttot):
    B, K, D = x.shape
    N = rr_row.shape[1]
    # Ensure >= 2 parallel steps for v7x's two TensorCores when batch is 1.
    min_steps = 2 if B == 1 else 1
    tn = _pick_lane_tile(D, min_steps)
    kernel = _make_kernel(Ttot)
    return pl.pallas_call(
        kernel,
        out_shape=jax.ShapeDtypeStruct((B, Ttot, D), jnp.float32),
        grid=(B, D // tn),
        in_specs=[
            pl.BlockSpec((1, N), lambda b, j: (0, 0)),
            pl.BlockSpec((1, N), lambda b, j: (0, 0)),
            pl.BlockSpec((pl.Squeezed(), K, tn), lambda b, j: (b, 0, j)),
        ],
        out_specs=pl.BlockSpec((pl.Squeezed(), Ttot, tn), lambda b, j: (b, 0, j)),
        compiler_params=pltpu.CompilerParams(
            dimension_semantics=("parallel", "parallel")),
    )(rr_row, th_row, x)


# ---------------------------------------------------------------------------
# Fallback path: small / odd D -> fold batch into lanes, pad lanes to 128.
# ---------------------------------------------------------------------------
def _forward_folded(rr_row, th_row, x, Ttot):
    B, K, D = x.shape
    N = rr_row.shape[1]
    BD = B * D
    x_flat = jnp.transpose(x, (1, 0, 2)).reshape(K, BD)          # wrapper copy (small-D fallback only)
    BDp = ((BD + 127) // 128) * 128
    if BDp != BD:
        x_flat = jnp.pad(x_flat, ((0, 0), (0, BDp - BD)))
    tn = _pick_lane_tile(BDp, 2 if BDp >= 256 else 1)
    kernel = _make_kernel(Ttot)
    out_flat = pl.pallas_call(
        kernel,
        out_shape=jax.ShapeDtypeStruct((Ttot, BDp), jnp.float32),
        grid=(BDp // tn,),
        in_specs=[
            pl.BlockSpec((1, N), lambda j: (0, 0)),
            pl.BlockSpec((1, N), lambda j: (0, 0)),
            pl.BlockSpec((K, tn), lambda j: (0, j)),
        ],
        out_specs=pl.BlockSpec((Ttot, tn), lambda j: (0, j)),
        compiler_params=pltpu.CompilerParams(
            dimension_semantics=("parallel",)),
    )(rr_row, th_row, x_flat)
    out_flat = out_flat[:, :BD]
    return jnp.transpose(out_flat.reshape(Ttot, B, D), (1, 0, 2))


def decoder_forward(rr, theta, x, T, PRE, compute_dtype=jnp.bfloat16):
    """rr, theta: (N,) float32; x: (B, 4*N+1, D) -> (B, T+PRE, D) float32."""
    Ttot = T + PRE
    B, K, D = x.shape
    N = rr.shape[0]
    assert K == 4 * N + 1, "x rows must be 4*N+1"

    rr_row = rr.reshape(1, N).astype(jnp.float32)
    th_row = theta.reshape(1, N).astype(jnp.float32)
    # bf16 matmul operands (f32 MXU accumulation); f32 path available for
    # strict-accuracy use.  Dictionary build stays f32 either way.
    x_in = x.astype(compute_dtype)

    if D >= 128 and D % 128 == 0:
        return _forward_direct(rr_row, th_row, x_in, Ttot)
    return _forward_folded(rr_row, th_row, x_in, Ttot)


# ---------------------------------------------------------------------------
# Reference (numpy, float64) for correctness checking.
# ---------------------------------------------------------------------------
def reference_forward(rr, theta, x, T, PRE):
    Ttot = T + PRE
    rr = np.asarray(rr, np.float64)
    theta = np.asarray(theta, np.float64)
    rows = []
    for i in range(Ttot):
        W1 = (rr ** i) * np.cos(i * theta)
        W2 = ((-rr) ** i) * np.cos(i * theta)
        W3 = (rr ** i) * np.sin(i * theta)
        W4 = ((-rr) ** i) * np.sin(i * theta)
        rows.append(np.concatenate([[1.0], W1, W2, W3, W4]))
    dic = np.stack(rows, axis=0)                                 # (Ttot, K)
    G = np.linalg.norm(dic, axis=0)
    G = np.where(G == 0.0, np.sqrt(Ttot), G)
    dic = dic / G
    return np.einsum("tk,bkd->btd", dic, np.asarray(x, np.float64))


if __name__ == "__main__":
    N = 32            # number of (rr, theta) pole pairs
    T, PRE = 8, 4     # observed frames + predicted frames
    K = 4 * N + 1     # dictionary width (129)

    key = jax.random.PRNGKey(0)
    k_rr, k_th, k_x1, k_x2 = jax.random.split(key, 4)

    # DYAN-style init: radii near 1, angles in (0, pi)
    rr = jax.random.uniform(k_rr, (N,), jnp.float32, 0.8, 1.1)
    theta = jax.random.uniform(k_th, (N,), jnp.float32, 0.05, 3.0)

    # Case 1: small feature dim -> folded/padded lane path.
    x1 = jax.random.normal(k_x1, (2, K, 16), jnp.float32)
    # Case 2: lane-friendly feature dim -> direct transpose-free path.
    x2 = jax.random.normal(k_x2, (2, K, 128), jnp.float32)

    for x, name in ((x1, "folded"), (x2, "direct")):
        ref = reference_forward(np.array(rr), np.array(theta), np.array(x), T, PRE)

        out_f32 = jax.block_until_ready(
            decoder_forward(rr, theta, x, T, PRE, compute_dtype=jnp.float32))
        if not np.allclose(np.array(out_f32), ref, rtol=1e-4, atol=1e-4):
            raise AssertionError(f"f32 path mismatch ({name})")

        out_bf16 = jax.block_until_ready(
            decoder_forward(rr, theta, x, T, PRE, compute_dtype=jnp.bfloat16))
        # bf16 operands + f32 accumulation: expected abs error ~1e-2.
        if not np.allclose(np.array(out_bf16), ref, rtol=2e-2, atol=1e-1):
            raise AssertionError(f"bf16 path mismatch ({name})")

    print("KERNEL_OK")
</pallas_src>

<mosaic_0001>
module attributes {stable_mosaic.version = 11 : i64} {
  func.func @decoder_kernel(%arg0: i32, %arg1: memref<1x32xf32, #tpu.memory_space<vmem>>, %arg2: memref<1x32xf32, #tpu.memory_space<vmem>>, %arg3: memref<129x128xf32, #tpu.memory_space<vmem>>, %arg4: memref<12x128xf32, #tpu.memory_space<vmem>>) attributes {dimension_semantics = [#tpu.dimension_semantics<parallel>], iteration_bounds = array<i64: 1>, scalar_prefetch = 0 : i64, scratch_operands = 0 : i64, tpu.core_type = #tpu.core_type<tc>, window_params = [{pipeline_mode = #tpu.pipeline_mode<synchronous>, transform_indices = @transform_0, window_bounds = array<i64: 1, 32>}, {pipeline_mode = #tpu.pipeline_mode<synchronous>, transform_indices = @transform_1, window_bounds = array<i64: 1, 32>}, {transform_indices = @transform_2, window_bounds = array<i64: 129, 128>}, {transform_indices = @transform_3, window_bounds = array<i64: 12, 128>}]} {
    %c0 = arith.constant 0 : index
    %c0_0 = arith.constant 0 : index
    %0 = vector.load %arg1[%c0, %c0_0] : memref<1x32xf32, #tpu.memory_space<vmem>>, vector<1x32xf32>
    %c0_1 = arith.constant 0 : index
    %c0_2 = arith.constant 0 : index
    %1 = vector.load %arg2[%c0_1, %c0_2] : memref<1x32xf32, #tpu.memory_space<vmem>>, vector<1x32xf32>
    %2 = tpu.iota {dimensions = array<i32: 0>} : vector<12x32xi32>
    %3 = arith.sitofp %2 : vector<12x32xi32> to vector<12x32xf32>
    %c2_i32 = arith.constant 2 : i32
    %c0_i32 = arith.constant 0 : i32
    %4 = arith.cmpi eq, %c2_i32, %c0_i32 : i32
    %c1_i32 = arith.constant 1 : i32
    %5 = arith.select %4, %c1_i32, %c2_i32 : i32
    %6 = vector.broadcast %5 : i32 to vector<12x32xi32>
    %7 = arith.remsi %2, %6 : vector<12x32xi32>
    %c0_i32_3 = arith.constant 0 : i32
    %8 = vector.broadcast %c0_i32_3 : i32 to vector<12x32xi32>
    %9 = arith.cmpi ne, %7, %8 : vector<12x32xi32>
    %c0_i32_4 = arith.constant 0 : i32
    %10 = vector.broadcast %c0_i32_4 : i32 to vector<12x32xi32>
    %11 = arith.cmpi slt, %7, %10 : vector<12x32xi32>
    %c0_i32_5 = arith.constant 0 : i32
    %12 = arith.cmpi slt, %5, %c0_i32_5 : i32
    %13 = vector.broadcast %12 : i1 to vector<12x32xi1>
    %14 = vector.broadcast %13 : vector<12x32xi1> to vector<12x32xi1>
    %15 = arith.xori %11, %14 : vector<12x32xi1>
    %16 = arith.andi %15, %9 : vector<12x32xi1>
    %17 = vector.broadcast %5 : i32 to vector<12x32xi32>
    %18 = arith.addi %7, %17 : vector<12x32xi32>
    %19 = arith.select %16, %18, %7 : vector<12x32xi1>, vector<12x32xi32>
    %c1_i32_6 = arith.constant 1 : i32
    %20 = vector.broadcast %c1_i32_6 : i32 to vector<12x32xi32>
    %21 = arith.cmpi eq, %19, %20 : vector<12x32xi32>
    %22 = math.absf %0 : vector<1x32xf32>
    %cst = arith.constant 0.000000e+00 : f32
    %23 = vector.broadcast %cst : f32 to vector<1x32xf32>
    %24 = arith.cmpf oeq, %22, %23 : vector<1x32xf32>
    %cst_7 = arith.constant 0.000000e+00 : f32
    %25 = vector.broadcast %cst_7 : f32 to vector<12x32xf32>
    %26 = arith.cmpf oeq, %3, %25 : vector<12x32xf32>
    %27 = vector.broadcast %24 : vector<1x32xi1> to vector<12x32xi1>
    %28 = arith.andi %27, %26 : vector<12x32xi1>
    %29 = vector.broadcast %22 : vector<1x32xf32> to vector<12x32xf32>
    %30 = math.powf %29, %3 : vector<12x32xf32>
    %cst_8 = arith.constant 1.000000e+00 : f32
    %31 = vector.broadcast %cst_8 : f32 to vector<12x32xf32>
    %32 = arith.select %28, %31, %30 : vector<12x32xi1>, vector<12x32xf32>
    %cst_9 = arith.constant 0.000000e+00 : f32
    %33 = vector.broadcast %cst_9 : f32 to vector<1x32xf32>
    %34 = arith.cmpf olt, %0, %33 : vector<1x32xf32>
    %35 = vector.broadcast %34 : vector<1x32xi1> to vector<12x32xi1>
    %36 = arith.andi %35, %21 : vector<12x32xi1>
    %cst_10 = arith.constant -1.000000e+00 : f32
    %cst_11 = arith.constant 1.000000e+00 : f32
    %37 = vector.broadcast %cst_10 : f32 to vector<12x32xf32>
    %38 = vector.broadcast %cst_11 : f32 to vector<12x32xf32>
    %39 = arith.select %36, %37, %38 : vector<12x32xi1>, vector<12x32xf32>
    %40 = arith.mulf %39, %32 : vector<12x32xf32>
    %cst_12 = arith.constant 0.000000e+00 : f32
    %41 = vector.broadcast %cst_12 : f32 to vector<12x32xf32>
    %42 = arith.subf %41, %40 : vector<12x32xf32>
    %43 = arith.select %21, %42, %40 : vector<12x32xi1>, vector<12x32xf32>
    %44 = vector.broadcast %1 : vector<1x32xf32> to vector<12x32xf32>
    %45 = arith.mulf %3, %44 : vector<12x32xf32>
    %46 = math.cos %45 : vector<12x32xf32>
    %47 = vector.broadcast %1 : vector<1x32xf32> to vector<12x32xf32>
    %48 = arith.mulf %3, %47 : vector<12x32xf32>
    %49 = math.sin %48 : vector<12x32xf32>
    %cst_13 = arith.constant 1.000000e+00 : f32
    %50 = vector.broadcast %cst_13 : f32 to vector<12x1xf32>
    %51 = arith.mulf %40, %46 : vector<12x32xf32>
    %52 = arith.mulf %43, %46 : vector<12x32xf32>
    %53 = arith.mulf %40, %49 : vector<12x32xf32>
    %54 = arith.mulf %43, %49 : vector<12x32xf32>
    %55 = tpu.concatenate %50, %51, %52, %53, %54 in 1 : vector<12x1xf32>, vector<12x32xf32>, vector<12x32xf32>, vector<12x32xf32>, vector<12x32xf32> -> vector<12x129xf32>
    %56 = arith.mulf %55, %55 : vector<12x129xf32>
    %cst_14 = arith.constant dense<0.000000e+00> : vector<129xf32>
    %57 = vector.multi_reduction <add>, %56, %cst_14 [0] : vector<12x129xf32> to vector<129xf32>
    %58 = vector.shape_cast %57 : vector<129xf32> to vector<1x129xf32>
    %59 = math.sqrt %58 : vector<1x129xf32>
    %cst_15 = arith.constant 0.000000e+00 : f32
    %60 = vector.broadcast %cst_15 : f32 to vector<1x129xf32>
    %61 = arith.cmpf oeq, %59, %60 : vector<1x129xf32>
    %cst_16 = arith.constant 1.200000e+01 : f32
    %62 = math.sqrt %cst_16 : f32
    %63 = vector.broadcast %62 : f32 to vector<1x129xf32>
    %64 = arith.select %61, %63, %59 : vector<1x129xi1>, vector<1x129xf32>
    %65 = vector.broadcast %64 : vector<1x129xf32> to vector<12x129xf32>
    %66 = arith.divf %55, %65 : vector<12x129xf32>
    %c0_17 = arith.constant 0 : index
    %c0_18 = arith.constant 0 : index
    %67 = vector.load %arg3[%c0_17, %c0_18] : memref<129x128xf32, #tpu.memory_space<vmem>>, vector<128x128xf32>
    %c128 = arith.constant 128 : index
    %c0_19 = arith.constant 0 : index
    %68 = vector.load %arg3[%c128, %c0_19] : memref<129x128xf32, #tpu.memory_space<vmem>>, vector<1x128xf32>
    %69 = vector.extract_strided_slice %66 {offsets = [0, 0], sizes = [12, 128], strides = [1, 1]} : vector<12x129xf32> to vector<12x128xf32>
    %cst_20 = arith.constant dense<0.000000e+00> : vector<12x128xf32>
    %70 = tpu.matmul %69, %67, %cst_20 {dimension_numbers = #tpu.dot_dimension_numbers<[1], [0], [0], [1], [0, 0, 1, 1], [], []>} : vector<12x128xf32>, vector<128x128xf32>, vector<12x128xf32> -> vector<12x128xf32>
    %71 = vector.extract_strided_slice %66 {offsets = [0, 128], sizes = [12, 1], strides = [1, 1]} : vector<12x129xf32> to vector<12x1xf32>
    %72 = vector.broadcast %71 : vector<12x1xf32> to vector<12x128xf32>
    %73 = vector.broadcast %68 : vector<1x128xf32> to vector<12x128xf32>
    %74 = arith.mulf %72, %73 : vector<12x128xf32>
    %75 = arith.addf %70, %74 : vector<12x128xf32>
    %c0_21 = arith.constant 0 : index
    %c0_22 = arith.constant 0 : index
    %76 = vector.load %arg4[%c0_21, %c0_22] : memref<12x128xf32, #tpu.memory_space<vmem>>, vector<12x128xf32>
    tpu.vector_store %arg4[%c0_21, %c0_22], %75 {strides = array<i32>} : memref<12x128xf32, #tpu.memory_space<vmem>>, vector<12x128xf32>,
    return
  }
  func.func @transform_0(%arg0: i32) -> (i32, i32) {
    %c0_i32 = arith.constant 0 : i32
    %c0_i32_0 = arith.constant 0 : i32
    %c0_i32_1 = arith.constant 0 : i32
    return %c0_i32, %c0_i32_0 : i32, i32
  }
  func.func @transform_1(%arg0: i32) -> (i32, i32) {
    %c0_i32 = arith.constant 0 : i32
    %c0_i32_0 = arith.constant 0 : i32
    %c0_i32_1 = arith.constant 0 : i32
    return %c0_i32, %c0_i32_0 : i32, i32
  }
  func.func @transform_2(%arg0: i32) -> (i32, i32) {
    %c0_i32 = arith.constant 0 : i32
    %c0_i32_0 = arith.constant 0 : i32
    return %c0_i32, %arg0 : i32, i32
  }
  func.func @transform_3(%arg0: i32) -> (i32, i32) {
    %c0_i32 = arith.constant 0 : i32
    %c0_i32_0 = arith.constant 0 : i32
    return %c0_i32, %arg0 : i32, i32
  }
}

</mosaic_0001>

<llo_original>
// kernel: tpu_custom_call.1
$region0: #{tpu_custom_call.1}
  #allocation0 [shape = 'u32[]', space=smem, size = 0x4, offset = 0x4, fixed_abs, tag = 'smem constant byte address 0x4 - core index']
  #allocation1 [shape = 'u32[144,128]{1,0:T(1,128)}', space=vmem, size = 0x12000, scoped, tag = 'internal scratch']
  %s0 = inlined_call_operand.hbm [shape: f32[1,32], index: 0, kind: input, shape index: {}]
  %s1 = inlined_call_operand.vmem [shape: f32[1,32], index: 1, kind: input, shape index: {}]
  %s2 = inlined_call_operand.hbm [shape: f32[129,128], index: 2, kind: input, shape index: {}]
  %s3 = inlined_call_operand.hbm [shape: f32[12,128], index: 3, kind: output, shape index: {}]
  %s4 = sld [smem:[#allocation0]]
  $region30: #{tpu_custom_call.1} parent=0
    _
  %s6 = ssub.s32 1, %s4
  %s7 = scalar_select 0, %s6, %s4
  $region1: #{tpu_custom_call.1} parent=0
    #allocation2 [shape = 'u8[512]{0}', space=vmem, size = 0x400, scoped, tag = 'input window, operand 0, single buffered']
    #allocation3 [shape = 's32[1]{0}', space=sflag, size = 0x4, scoped, tag = 'scoped memory for tpu_custom_call.1']
    #allocation4 [shape = 's32[1]{0}', space=sflag, size = 0x4, scoped, tag = 'scoped memory for tpu_custom_call.1']
    #allocation5 [shape = 'u8[69632]{0}', space=vmem, size = 0x11000, scoped, tag = 'input window, operand 2, single buffered']
    #allocation6 [shape = 's32[1]{0}', space=sflag, size = 0x4, scoped, tag = 'scoped memory for tpu_custom_call.1']
    #allocation7 [shape = 'u8[8192]{0}', space=vmem, size = 0x2000, scoped, tag = 'output window, operand 0, single buffered']
    %8 = vsyncpa [#allocation3], 0
    %9 = vsyncpa [#allocation6], 0
    %10 = vsyncpa [#allocation4], 0
    // Predicated region
    $region2: #{tpu_custom_call.1} parent=1 // pred_check
      _
    $region3: #{tpu_custom_call.1} parent=1 // pred_check_branch
      %12 = sbr.rel (0) target = $region5
    $region4: #{tpu_custom_call.1} parent=1 // pred_region
      %s14 = ssub.s32 16, 16
      %15 = vsyncadd [#allocation3], %s14
      %s17 = sshll.u32 [#allocation2], 4
      %s18 = int_to_ptr.vmem [resolvable:$true] %s17
      %20 = dma.hbm_to_vmem [thread:$0]  %s0, 16, %s18, [#allocation3]
    $region5: #{tpu_custom_call.1} parent=1 // pred_fallthru
      _
    // Predicated region
    $region6: #{tpu_custom_call.1} parent=1 // pred_check
      _
    $region7: #{tpu_custom_call.1} parent=1 // pred_check_branch
      %22 = sbr.rel (0) target = $region9
    $region8: #{tpu_custom_call.1} parent=1 // pred_region
      _
    $region9: #{tpu_custom_call.1} parent=1 // pred_fallthru
      _
    // Predicated region
    $region10: #{tpu_custom_call.1} parent=1 // pred_check
      _
    $region11: #{tpu_custom_call.1} parent=1 // pred_check_branch
      %24 = sbr.rel (0) target = $region13
    $region12: #{tpu_custom_call.1} parent=1 // pred_region
      %s26 = ssub.s32 2176, 2176
      %27 = vsyncadd [#allocation6], %s26
      %s28 = sshll.u32 [#allocation5], 4
      %s29 = int_to_ptr.vmem [resolvable:$true] %s28
      %34 = dma.hbm_to_vmem [thread:$0]  %s2, 2176, %s29, [#allocation6], 128, 128, 8
    $region13: #{tpu_custom_call.1} parent=1 // pred_fallthru
      _
    // Predicated region
    $region14: #{tpu_custom_call.1} parent=1 // pred_check
      _
    $region15: #{tpu_custom_call.1} parent=1 // pred_check_branch
      %36 = sbr.rel (0) target = $region17
    $region16: #{tpu_custom_call.1} parent=1 // pred_region
      %37 = dma.done [#allocation3], 16
    $region17: #{tpu_custom_call.1} parent=1 // pred_fallthru
      _
    // Predicated region
    $region18: #{tpu_custom_call.1} parent=1 // pred_check
      _
    $region19: #{tpu_custom_call.1} parent=1 // pred_check_branch
      %39 = sbr.rel (0) target = $region21
    $region20: #{tpu_custom_call.1} parent=1 // pred_region
      %40 = dma.done [#allocation6], 2176
    $region21: #{tpu_custom_call.1} parent=1 // pred_fallthru
      _
    %v41 = vld [vmem:[#allocation2] sm:$0x1]
    %v42 = vld [vmem:[%s1] sm:$0x1]
    %v43 = vlaneseq
    %v44 = vshrl.u32 %v43, 7
    %v45 = vadd.s32 %v44, 8
    %v46 = vcvt.s32.f32 %v44
    %v47 = vcvt.s32.f32 %v45
    %vm48 = vcmp.lt.s32.totalorder %v44, 0
    %v49 = vsub.s32 0, %v44
    %v50 = vsel %vm48, %v49, %v44
    %v51 = vshrl.u32 %v50, 1
    %v52 = vand.u32 %v50, 1
    %v53 = vsub.s32 0, %v52
    %v54 = vsel %vm48, %v53, %v52
    %vm55 = vcmp.lt.s32.totalorder %v45, 0
    %v56 = vsub.s32 0, %v45
    %v57 = vsel %vm55, %v56, %v45
    %v58 = vshrl.u32 %v57, 1
    %v59 = vand.u32 %v57, 1
    %v60 = vsub.s32 0, %v59
    %v61 = vsel %vm55, %v60, %v59
    %vm62 = vcmp.ne.s32.totalorder %v54, 0
    %vm63 = vcmp.ne.s32.totalorder %v61, 0
    %vm64 = vcmp.lt.s32.totalorder %v54, 0
    %vm65 = vcmp.lt.s32.totalorder %v61, 0
    %vm66 = vmand %vm64, %vm62
    %vm67 = vmand %vm65, %vm63
    %v68 = vadd.s32 %v54, 2
    %v69 = vadd.s32 %v61, 2
    %v70 = vsel %vm66, %v68, %v54
    %v71 = vsel %vm67, %v69, %v61
    %vm72 = vcmp.eq.s32.totalorder %v70, 1
    %vm73 = vcmp.eq.s32.totalorder %v71, 1
    %v74 = vand.u32 2147483647, %v41
    %vm75 = vcmp.eq.f32.partialorder %v74, 0.0
    %vm76 = vcmp.eq.f32.partialorder %v46, 0.0
    %vm77 = vcmp.eq.f32.partialorder %v47, 0.0
    %v78 = vsel %vm75, 1, 0
    %v79 = vlaneseq
    %v80 = vshrl.u32 %v79, 7
    %v81 = vsub.s32 0, %v80
    %v82 = vrot.slane %v78, %v81
    %vm83 = vcmp.eq.s32.totalorder %v82, 1
    %vm84 = vmand %vm83, %vm76
    %vm85 = vmand %vm83, %vm77
    %v87 = vlaneseq
    %v88 = vshrl.u32 %v87, 7
    %v89 = vsub.s32 0, %v88
    %v90 = vrot.slane %v74, %v89
    %v92 = vpow.f32 %v90, %v46
    %v93 = vpow.f32 %v90, %v47
    %v94 = vsel %vm84, 1.0, %v92
    %v95 = vsel %vm85, 1.0, %v93
    %vm96 = vcmp.lt.f32.partialorder %v41, 0.0
    %v97 = vsel %vm96, 1, 0
    %v98 = vlaneseq
    %v99 = vshrl.u32 %v98, 7
    %v100 = vsub.s32 0, %v99
    %v101 = vrot.slane %v97, %v100
    %vm102 = vcmp.eq.s32.totalorder %v101, 1
    %vm103 = vmand %vm102, %vm72
    %vm104 = vmand %vm102, %vm73
    %v105 = vsel %vm103, -1.0, 1.0
    %v106 = vsel %vm104, -1.0, 1.0
    %v107 = vmul.f32 %v105, %v94
    %v108 = vmul.f32 %v106, %v95
    %v109 = vsub.f32 0.0, %v107
    %v110 = vsub.f32 0.0, %v108
    %v111 = vsel %vm72, %v109, %v107
    %v112 = vsel %vm73, %v110, %v108
    %v114 = vlaneseq
    %v115 = vshrl.u32 %v114, 7
    %v116 = vsub.s32 0, %v115
    %v117 = vrot.slane %v42, %v116
    %v119 = vmul.f32 %v46, %v117
    %v120 = vmul.f32 %v47, %v117
    %v121 = vand.u32 2147483647, %v119
    %vm122 = vcmp.le.f32.partialorder %v121, 0.7853982
    %vm123 = vcmp.lt.s32.totalorder %v119, 0
    %v124 = vand.u32 %v119, 2139095040
    %v125 = vshrl.u32 %v124, 23
    %v126 = vsub.s32 %v125, 127
    %v127 = vand.u32 2147483647, %v119
    %v128 = vand.u32 %v127, 8388607
    %v129 = vor.u32 %v128, 8388608
    %v130 = vsub.s32 0, %v129
    %v131 = vadd.s32 %v126, 1
    %vm132 = vcmp.gt.s32.totalorder %v131, 0
    %v133 = vsel %vm132, %v131, 0
    %v134 = vshrl.u32 %v133, 5
    %v135 = vand.u32 %v133, 31
    %v136 = vsub.s32 32, %v135
    %v137 = vshrl.u32 683565275, %v136
    %v138 = vshll.u32 683565275, %v135
    %v139 = vshrl.u32 2475754826, %v136
    %v140 = vor.u32 %v138, %v139
    %v141 = vshll.u32 2475754826, %v135
    %v142 = vshrl.u32 2131351028, %v136
    %v143 = vor.u32 %v141, %v142
    %v144 = vshll.u32 2131351028, %v135
    %v145 = vshrl.u32 2102212464, %v136
    %v146 = vor.u32 %v144, %v145
    %v147 = vshll.u32 2102212464, %v135
    %v148 = vshrl.u32 920167782, %v136
    %v149 = vor.u32 %v147, %v148
    %v150 = vshll.u32 920167782, %v135
    %v151 = vshrl.u32 1326507024, %v136
    %v152 = vor.u32 %v150, %v151
    %vm153 = vcmp.lt.s32.totalorder %v134, 1
    %vm154 = vcmp.lt.s32.totalorder %v134, 2
    %vm155 = vcmp.lt.s32.totalorder %v134, 3
    %vm156 = vcmp.lt.s32.totalorder %v134, 4
    %v157 = vsel %vm153, %v137, %v140
    %v158 = vsel %vm156, %v146, 2102212464
    %v159 = vsel %vm155, %v143, %v158
    %v160 = vsel %vm154, %v157, %v159
    %v161 = vsel %vm153, %v140, %v143
    %v162 = vsel %vm156, %v149, 920167782
    %v163 = vsel %vm155, %v146, %v162
    %v164 = vsel %vm154, %v161, %v163
    %v165 = vsel %vm153, %v143, %v146
    %v166 = vsel %vm156, %v152, 1326507024
    %v167 = vsel %vm155, %v149, %v166
    %v168 = vsel %vm154, %v165, %v167
    %v169 = vshll.u32 %v129, 8
    %v170 = vmul.u32.u64.compose %v169, %v168
    %v171 = vextract.low.u32 %v170
    %v172 = vextract.high.u32 %v170
    %v173 = vmul.u32.u64.compose %v169, %v164
    %v174 = vextract.low.u32 %v173
    %v175 = vextract.high.u32 %v173
    %v176 = vmul.u32 %v169, %v160
    %v177 = vadd.s32 %v172, %v174
    %vm178 = vc.u32 %v172, %v174
    %v179 = vadd.s32 %v175, 1
    %v180 = vsel %vm178, %v179, %v175
    %v181 = vadd.s32 %v176, %v180
    %v182 = vadd.s32 %v181, 536870912
    %v183 = vshrl.u32 %v182, 30
    %v184 = vshll.u32 %v183, 30
    %v185 = vsub.s32 %v181, %v184
    %vm186 = vcmp.lt.s32.totalorder %v185, 0
    %v187 = vsub.s32 0, %v185
    %v188 = vsel %vm186, %v187, %v185
    %v189 = vclz %v188
    %v190 = vsub.s32 %v189, 2
    %vm191 = vcmp.gt.s32.totalorder 0, %v190
    %v192 = vsel %vm191, 0, %v190
    %v193 = vsub.s32 32, %v192
    %v194 = vshll.u32 %v185, %v192
    %v195 = vshrl.u32 %v177, %v193
    %v196 = vor.u32 %v194, %v195
    %v197 = vsub.s32 4294967266, %v192
    %v198 = vadd.s32 %v197, 127
    %v199 = vshll.u32 %v198, 23
    %v200 = vor.u32 4788187, %v199
    %v201 = vand.u32 2147483647, %v200
    %v203 = vcvt.s32.f32 %v196
    %v204 = vmul.f32 %v203, %v201
    %v205 = vxor.u32 %v204, 2147483648
    %v206 = vsel %vm123, %v205, %v204
    %v207 = vsub.s32 4, %v183
    %v208 = vsel %vm123, %v207, %v183
    %v209 = vsel %vm122, %v119, %v206
    %v210 = vsel %vm122, 0, %v208
    %v211 = vcosq.f32.pop %v209
    %v212 = vsinq.f32.pop %v209
    %vm213 = vweird.f32 %v119
    %v214 = vand.u32 %v210, 3
    %vm215 = vcmp.lt.s32.totalorder %v214, 2
    %vm216 = vcmp.eq.s32.totalorder %v214, 0
    %v217 = vxor.u32 %v212, 2147483648
    %v218 = vsel %vm216, %v211, %v217
    %vm219 = vcmp.eq.s32.totalorder %v214, 2
    %v220 = vxor.u32 %v211, 2147483648
    %v221 = vsel %vm219, %v220, %v212
    %v222 = vsel %vm215, %v218, %v221
    %v223 = vsel %vm213, nan, %v222
    %v224 = vand.u32 2147483647, %v120
    %vm225 = vcmp.le.f32.partialorder %v224, 0.7853982
    %vm226 = vcmp.lt.s32.totalorder %v120, 0
    %v227 = vand.u32 %v120, 2139095040
    %v228 = vshrl.u32 %v227, 23
    %v229 = vsub.s32 %v228, 127
    %v230 = vand.u32 2147483647, %v120
    %v231 = vand.u32 %v230, 8388607
    %v232 = vor.u32 %v231, 8388608
    %v233 = vsub.s32 0, %v232
    %v234 = vadd.s32 %v229, 1
    %vm235 = vcmp.gt.s32.totalorder %v234, 0
    %v236 = vsel %vm235, %v234, 0
    %v237 = vshrl.u32 %v236, 5
    %v238 = vand.u32 %v236, 31
    %v239 = vsub.s32 32, %v238
    %v240 = vshrl.u32 683565275, %v239
    %v241 = vshll.u32 683565275, %v238
    %v242 = vshrl.u32 2475754826, %v239
    %v243 = vor.u32 %v241, %v242
    %v244 = vshll.u32 2475754826, %v238
    %v245 = vshrl.u32 2131351028, %v239
    %v246 = vor.u32 %v244, %v245
    %v247 = vshll.u32 2131351028, %v238
    %v248 = vshrl.u32 2102212464, %v239
    %v249 = vor.u32 %v247, %v248
    %v250 = vshll.u32 2102212464, %v238
    %v251 = vshrl.u32 920167782, %v239
    %v252 = vor.u32 %v250, %v251
    %v253 = vshll.u32 920167782, %v238
    %v254 = vshrl.u32 1326507024, %v239
    %v255 = vor.u32 %v253, %v254
    %vm256 = vcmp.lt.s32.totalorder %v237, 1
    %vm257 = vcmp.lt.s32.totalorder %v237, 2
    %vm258 = vcmp.lt.s32.totalorder %v237, 3
    %vm259 = vcmp.lt.s32.totalorder %v237, 4
    %v260 = vsel %vm256, %v240, %v243
    %v261 = vsel %vm259, %v249, 2102212464
    %v262 = vsel %vm258, %v246, %v261
    %v263 = vsel %vm257, %v260, %v262
    %v264 = vsel %vm256, %v243, %v246
    %v265 = vsel %vm259, %v252, 920167782
    %v266 = vsel %vm258, %v249, %v265
    %v267 = vsel %vm257, %v264, %v266
    %v268 = vsel %vm256, %v246, %v249
    %v269 = vsel %vm259, %v255, 1326507024
    %v270 = vsel %vm258, %v252, %v269
    %v271 = vsel %vm257, %v268, %v270
    %v272 = vshll.u32 %v232, 8
    %v273 = vmul.u32.u64.compose %v272, %v271
    %v274 = vextract.low.u32 %v273
    %v275 = vextract.high.u32 %v273
    %v276 = vmul.u32.u64.compose %v272, %v267
    %v277 = vextract.low.u32 %v276
    %v278 = vextract.high.u32 %v276
    %v279 = vmul.u32 %v272, %v263
    %v280 = vadd.s32 %v275, %v277
    %vm281 = vc.u32 %v275, %v277
    %v282 = vadd.s32 %v278, 1
    %v283 = vsel %vm281, %v282, %v278
    %v284 = vadd.s32 %v279, %v283
    %v285 = vadd.s32 %v284, 536870912
    %v286 = vshrl.u32 %v285, 30
    %v287 = vshll.u32 %v286, 30
    %v288 = vsub.s32 %v284, %v287
    %vm289 = vcmp.lt.s32.totalorder %v288, 0
    %v290 = vsub.s32 0, %v288
    %v291 = vsel %vm289, %v290, %v288
    %v292 = vclz %v291
    %v293 = vsub.s32 %v292, 2
    %vm294 = vcmp.gt.s32.totalorder 0, %v293
    %v295 = vsel %vm294, 0, %v293
    %v296 = vsub.s32 32, %v295
    %v297 = vshll.u32 %v288, %v295
    %v298 = vshrl.u32 %v280, %v296
    %v299 = vor.u32 %v297, %v298
    %v300 = vsub.s32 4294967266, %v295
    %v301 = vadd.s32 %v300, 127
    %v302 = vshll.u32 %v301, 23
    %v303 = vor.u32 4788187, %v302
    %v304 = vand.u32 2147483647, %v303
    %v306 = vcvt.s32.f32 %v299
    %v307 = vmul.f32 %v306, %v304
    %v308 = vxor.u32 %v307, 2147483648
    %v309 = vsel %vm226, %v308, %v307
    %v310 = vsub.s32 4, %v286
    %v311 = vsel %vm226, %v310, %v286
    %v312 = vsel %vm225, %v120, %v309
    %v313 = vsel %vm225, 0, %v311
    %v314 = vcosq.f32.pop %v312
    %v315 = vsinq.f32.pop %v312
    %vm316 = vweird.f32 %v120
    %v317 = vand.u32 %v313, 3
    %vm318 = vcmp.lt.s32.totalorder %v317, 2
    %vm319 = vcmp.eq.s32.totalorder %v317, 0
    %v320 = vxor.u32 %v315, 2147483648
    %v321 = vsel %vm319, %v314, %v320
    %vm322 = vcmp.eq.s32.totalorder %v317, 2
    %v323 = vxor.u32 %v314, 2147483648
    %v324 = vsel %vm322, %v323, %v315
    %v325 = vsel %vm318, %v321, %v324
    %v326 = vsel %vm316, nan, %v325
    %v327 = vand.u32 2147483647, %v119
    %vm328 = vcmp.le.f32.partialorder %v327, 0.7853982
    %vm329 = vcmp.lt.s32.totalorder %v119, 0
    %v330 = vand.u32 %v119, 2139095040
    %v331 = vshrl.u32 %v330, 23
    %v332 = vsub.s32 %v331, 127
    %v333 = vand.u32 2147483647, %v119
    %v334 = vand.u32 %v333, 8388607
    %v335 = vor.u32 %v334, 8388608
    %v336 = vsub.s32 0, %v335
    %v337 = vadd.s32 %v332, 1
    %vm338 = vcmp.gt.s32.totalorder %v337, 0
    %v339 = vsel %vm338, %v337, 0
    %v340 = vshrl.u32 %v339, 5
    %v341 = vand.u32 %v339, 31
    %v342 = vsub.s32 32, %v341
    %v343 = vshrl.u32 683565275, %v342
    %v344 = vshll.u32 683565275, %v341
    %v345 = vshrl.u32 2475754826, %v342
    %v346 = vor.u32 %v344, %v345
    %v347 = vshll.u32 2475754826, %v341
    %v348 = vshrl.u32 2131351028, %v342
    %v349 = vor.u32 %v347, %v348
    %v350 = vshll.u32 2131351028, %v341
    %v351 = vshrl.u32 2102212464, %v342
    %v352 = vor.u32 %v350, %v351
    %v353 = vshll.u32 2102212464, %v341
    %v354 = vshrl.u32 920167782, %v342
    %v355 = vor.u32 %v353, %v354
    %v356 = vshll.u32 920167782, %v341
    %v357 = vshrl.u32 1326507024, %v342
    %v358 = vor.u32 %v356, %v357
    %vm359 = vcmp.lt.s32.totalorder %v340, 1
    %vm360 = vcmp.lt.s32.totalorder %v340, 2
    %vm361 = vcmp.lt.s32.totalorder %v340, 3
    %vm362 = vcmp.lt.s32.totalorder %v340, 4
    %v363 = vsel %vm359, %v343, %v346
    %v364 = vsel %vm362, %v352, 2102212464
    %v365 = vsel %vm361, %v349, %v364
    %v366 = vsel %vm360, %v363, %v365
    %v367 = vsel %vm359, %v346, %v349
    %v368 = vsel %vm362, %v355, 920167782
    %v369 = vsel %vm361, %v352, %v368
    %v370 = vsel %vm360, %v367, %v369
    %v371 = vsel %vm359, %v349, %v352
    %v372 = vsel %vm362, %v358, 1326507024
    %v373 = vsel %vm361, %v355, %v372
    %v374 = vsel %vm360, %v371, %v373
    %v375 = vshll.u32 %v335, 8
    %v376 = vmul.u32.u64.compose %v375, %v374
    %v377 = vextract.low.u32 %v376
    %v378 = vextract.high.u32 %v376
    %v379 = vmul.u32.u64.compose %v375, %v370
    %v380 = vextract.low.u32 %v379
    %v381 = vextract.high.u32 %v379
    %v382 = vmul.u32 %v375, %v366
    %v383 = vadd.s32 %v378, %v380
    %vm384 = vc.u32 %v378, %v380
    %v385 = vadd.s32 %v381, 1
    %v386 = vsel %vm384, %v385, %v381
    %v387 = vadd.s32 %v382, %v386
    %v388 = vadd.s32 %v387, 536870912
    %v389 = vshrl.u32 %v388, 30
    %v390 = vshll.u32 %v389, 30
    %v391 = vsub.s32 %v387, %v390
    %vm392 = vcmp.lt.s32.totalorder %v391, 0
    %v393 = vsub.s32 0, %v391
    %v394 = vsel %vm392, %v393, %v391
    %v395 = vclz %v394
    %v396 = vsub.s32 %v395, 2
    %vm397 = vcmp.gt.s32.totalorder 0, %v396
    %v398 = vsel %vm397, 0, %v396
    %v399 = vsub.s32 32, %v398
    %v400 = vshll.u32 %v391, %v398
    %v401 = vshrl.u32 %v383, %v399
    %v402 = vor.u32 %v400, %v401
    %v403 = vsub.s32 4294967266, %v398
    %v404 = vadd.s32 %v403, 127
    %v405 = vshll.u32 %v404, 23
    %v406 = vor.u32 4788187, %v405
    %v407 = vand.u32 2147483647, %v406
    %v409 = vcvt.s32.f32 %v402
    %v410 = vmul.f32 %v409, %v407
    %v411 = vxor.u32 %v410, 2147483648
    %v412 = vsel %vm329, %v411, %v410
    %v413 = vsub.s32 4, %v389
    %v414 = vsel %vm329, %v413, %v389
    %v415 = vsel %vm328, %v119, %v412
    %v416 = vsel %vm328, 0, %v414
    %v417 = vcosq.f32.pop %v415
    %v418 = vsinq.f32.pop %v415
    %vm419 = vweird.f32 %v119
    %v420 = vadd.s32 %v416, 3
    %v421 = vand.u32 %v420, 3
    %vm422 = vcmp.lt.s32.totalorder %v421, 2
    %vm423 = vcmp.eq.s32.totalorder %v421, 0
    %v424 = vxor.u32 %v418, 2147483648
    %v425 = vsel %vm423, %v417, %v424
    %vm426 = vcmp.eq.s32.totalorder %v421, 2
    %v427 = vxor.u32 %v417, 2147483648
    %v428 = vsel %vm426, %v427, %v418
    %v429 = vsel %vm422, %v425, %v428
    %v430 = vsel %vm419, nan, %v429
    %v431 = vand.u32 2147483647, %v120
    %vm432 = vcmp.le.f32.partialorder %v431, 0.7853982
    %vm433 = vcmp.lt.s32.totalorder %v120, 0
    %v434 = vand.u32 %v120, 2139095040
    %v435 = vshrl.u32 %v434, 23
    %v436 = vsub.s32 %v435, 127
    %v437 = vand.u32 2147483647, %v120
    %v438 = vand.u32 %v437, 8388607
    %v439 = vor.u32 %v438, 8388608
    %v440 = vsub.s32 0, %v439
    %v441 = vadd.s32 %v436, 1
    %vm442 = vcmp.gt.s32.totalorder %v441, 0
    %v443 = vsel %vm442, %v441, 0
    %v444 = vshrl.u32 %v443, 5
    %v445 = vand.u32 %v443, 31
    %v446 = vsub.s32 32, %v445
    %v447 = vshrl.u32 683565275, %v446
    %v448 = vshll.u32 683565275, %v445
    %v449 = vshrl.u32 2475754826, %v446
    %v450 = vor.u32 %v448, %v449
    %v451 = vshll.u32 2475754826, %v445
    %v452 = vshrl.u32 2131351028, %v446
    %v453 = vor.u32 %v451, %v452
    %v454 = vshll.u32 2131351028, %v445
    %v455 = vshrl.u32 2102212464, %v446
    %v456 = vor.u32 %v454, %v455
    %v457 = vshll.u32 2102212464, %v445
    %v458 = vshrl.u32 920167782, %v446
    %v459 = vor.u32 %v457, %v458
    %v460 = vshll.u32 920167782, %v445
    %v461 = vshrl.u32 1326507024, %v446
    %v462 = vor.u32 %v460, %v461
    %vm463 = vcmp.lt.s32.totalorder %v444, 1
    %vm464 = vcmp.lt.s32.totalorder %v444, 2
    %vm465 = vcmp.lt.s32.totalorder %v444, 3
    %vm466 = vcmp.lt.s32.totalorder %v444, 4
    %v467 = vsel %vm463, %v447, %v450
    %v468 = vsel %vm466, %v456, 2102212464
    %v469 = vsel %vm465, %v453, %v468
    %v470 = vsel %vm464, %v467, %v469
    %v471 = vsel %vm463, %v450, %v453
    %v472 = vsel %vm466, %v459, 920167782
    %v473 = vsel %vm465, %v456, %v472
    %v474 = vsel %vm464, %v471, %v473
    %v475 = vsel %vm463, %v453, %v456
    %v476 = vsel %vm466, %v462, 1326507024
    %v477 = vsel %vm465, %v459, %v476
    %v478 = vsel %vm464, %v475, %v477
    %v479 = vshll.u32 %v439, 8
    %v480 = vmul.u32.u64.compose %v479, %v478
    %v481 = vextract.low.u32 %v480
    %v482 = vextract.high.u32 %v480
    %v483 = vmul.u32.u64.compose %v479, %v474
    %v484 = vextract.low.u32 %v483
    %v485 = vextract.high.u32 %v483
    %v486 = vmul.u32 %v479, %v470
    %v487 = vadd.s32 %v482, %v484
    %vm488 = vc.u32 %v482, %v484
    %v489 = vadd.s32 %v485, 1
    %v490 = vsel %vm488, %v489, %v485
    %v491 = vadd.s32 %v486, %v490
    %v492 = vadd.s32 %v491, 536870912
    %v493 = vshrl.u32 %v492, 30
    %v494 = vshll.u32 %v493, 30
    %v495 = vsub.s32 %v491, %v494
    %vm496 = vcmp.lt.s32.totalorder %v495, 0
    %v497 = vsub.s32 0, %v495
    %v498 = vsel %vm496, %v497, %v495
    %v499 = vclz %v498
    %v500 = vsub.s32 %v499, 2
    %vm501 = vcmp.gt.s32.totalorder 0, %v500
    %v502 = vsel %vm501, 0, %v500
    %v503 = vsub.s32 32, %v502
    %v504 = vshll.u32 %v495, %v502
    %v505 = vshrl.u32 %v487, %v503
    %v506 = vor.u32 %v504, %v505
    %v507 = vsub.s32 4294967266, %v502
    %v508 = vadd.s32 %v507, 127
    %v509 = vshll.u32 %v508, 23
    %v510 = vor.u32 4788187, %v509
    %v511 = vand.u32 2147483647, %v510
    %v513 = vcvt.s32.f32 %v506
    %v514 = vmul.f32 %v513, %v511
    %v515 = vxor.u32 %v514, 2147483648
    %v516 = vsel %vm433, %v515, %v514
    %v517 = vsub.s32 4, %v493
    %v518 = vsel %vm433, %v517, %v493
    %v519 = vsel %vm432, %v120, %v516
    %v520 = vsel %vm432, 0, %v518
    %v521 = vcosq.f32.pop %v519
    %v522 = vsinq.f32.pop %v519
    %vm523 = vweird.f32 %v120
    %v524 = vadd.s32 %v520, 3
    %v525 = vand.u32 %v524, 3
    %vm526 = vcmp.lt.s32.totalorder %v525, 2
    %vm527 = vcmp.eq.s32.totalorder %v525, 0
    %v528 = vxor.u32 %v522, 2147483648
    %v529 = vsel %vm527, %v521, %v528
    %vm530 = vcmp.eq.s32.totalorder %v525, 2
    %v531 = vxor.u32 %v521, 2147483648
    %v532 = vsel %vm530, %v531, %v522
    %v533 = vsel %vm526, %v529, %v532
    %v534 = vsel %vm523, nan, %v533
    %v535 = vmul.f32 %v107, %v223
    %v536 = vmul.f32 %v108, %v326
    %v537 = vmul.f32 %v111, %v223
    %v538 = vmul.f32 %v112, %v326
    %v539 = vmul.f32 %v107, %v430
    %v540 = vmul.f32 %v108, %v534
    %v541 = vmul.f32 %v111, %v430
    %v542 = vmul.f32 %v112, %v534
    %545 = vrot.lane.b32.xlu0 %v535, 1
    %v546 = vpop.permute.xlu0 %545
    %547 = vrot.lane.b32.xlu0 %v536, 1
    %v548 = vpop.permute.xlu0 %547
    %553 = vrot.lane.b32.xlu0 %v537, 33
    %v554 = vpop.permute.xlu0 %553
    %555 = vrot.lane.b32.xlu0 %v538, 33
    %v556 = vpop.permute.xlu0 %555
    %561 = vrot.lane.b32.xlu0 %v539, 65
    %v562 = vpop.permute.xlu0 %561
    %563 = vrot.lane.b32.xlu0 %v540, 65
    %v564 = vpop.permute.xlu0 %563
    %569 = vrot.lane.b32.xlu0 %v541, 97
    %v570 = vpop.permute.xlu0 %569
    %571 = vrot.lane.b32.xlu0 %v542, 97
    %v572 = vpop.permute.xlu0 %571
    %vm575 = vcmask 7168
    %v576 = vsel %vm575, 1.0, %v546
    %v577 = vsel %vm575, 1.0, %v548
    %vm578 = vcmask 269312
    %v579 = vsel %vm578, %v576, %v554
    %v580 = vsel %vm578, %v577, %v556
    %vm581 = vcmask 531456
    %v582 = vsel %vm581, %v579, %v562
    %v583 = vsel %vm581, %v580, %v564
    %vm584 = vcmask 793600
    %v585 = vsel %vm584, %v582, %v570
    %v586 = vsel %vm584, %v583, %v572
    %v587 = vmul.f32 %v585, %v585
    %v588 = vmul.f32 %v570, %v570
    %v589 = vmul.f32 %v586, %v586
    %v590 = vmul.f32 %v572, %v572
    %vm591 = vcmask 1043456
    %v592 = vsel %vm591, %v589, 0.0
    %v593 = vadd.f32 %v587, %v592
    %v594 = vrot.slane %v593, 4
    %v595 = vadd.f32 %v593, %v594
    %v596 = vrot.slane %v595, 2
    %v597 = vadd.f32 %v595, %v596
    %v598 = vrot.slane %v597, 1
    %v599 = vadd.f32 %v597, %v598
    %v600 = vsel %vm575, %v588, 0.0
    %vm601 = vcmask 3072
    %v602 = vsel %vm601, %v590, 0.0
    %v603 = vadd.f32 %v600, %v602
    %v604 = vrot.slane %v603, 4
    %v605 = vadd.f32 %v603, %v604
    %v606 = vrot.slane %v605, 2
    %v607 = vadd.f32 %v605, %v606
    %v608 = vrot.slane %v607, 1
    %v609 = vadd.f32 %v607, %v608
    %v610 = vrsqrt.pop %v599
    %v611 = vmul.f32 %v599, %v610
    %vm612 = vcmp.eq.f32.partialorder %v599, inf
    %v613 = vsel %vm612, %v599, %v611
    %vm614 = vcmp.eq.f32.partialorder %v599, 0.0
    %v615 = vand.u32 %v599, 2147483648
    %v616 = vsel %vm614, %v615, %v613
    %v617 = vrsqrt.pop %v609
    %v618 = vmul.f32 %v609, %v617
    %vm619 = vcmp.eq.f32.partialorder %v609, inf
    %v620 = vsel %vm619, %v609, %v618
    %vm621 = vcmp.eq.f32.partialorder %v609, 0.0
    %v622 = vand.u32 %v609, 2147483648
    %v623 = vsel %vm621, %v622, %v620
    %vm624 = vcmp.eq.f32.partialorder %v616, 0.0
    %vm625 = vcmp.eq.f32.partialorder %v623, 0.0
    %v626 = vsel %vm624, 3.4641016, %v616
    %v627 = vsel %vm625, 3.4641016, %v623
    %v628 = vrcp.pop %v626
    %v629 = vmul.f32 %v585, %v628
    %v630 = vrcp.pop %v627
    %v631 = vmul.f32 %v570, %v630
    %v632 = vmul.f32 %v586, %v628
    %v633 = vmul.f32 %v572, %v630
    %v634 = vld [vmem:[#allocation5] sm:$0xff]
    %v635 = vld [vmem:[#allocation5 + $0x8] sm:$0xff]
    %v636 = vld [vmem:[#allocation5 + $0x10] sm:$0xff]
    %v637 = vld [vmem:[#allocation5 + $0x18] sm:$0xff]
    %v638 = vld [vmem:[#allocation5 + $0x20] sm:$0xff]
    %v639 = vld [vmem:[#allocation5 + $0x28] sm:$0xff]
    %v640 = vld [vmem:[#allocation5 + $0x30] sm:$0xff]
    %v641 = vld [vmem:[#allocation5 + $0x38] sm:$0xff]
    %v642 = vld [vmem:[#allocation5 + $0x40] sm:$0xff]
    %v643 = vld [vmem:[#allocation5 + $0x48] sm:$0xff]
    %v644 = vld [vmem:[#allocation5 + $0x50] sm:$0xff]
    %v645 = vld [vmem:[#allocation5 + $0x58] sm:$0xff]
    %v646 = vld [vmem:[#allocation5 + $0x60] sm:$0xff]
    %v647 = vld [vmem:[#allocation5 + $0x68] sm:$0xff]
    %v648 = vld [vmem:[#allocation5 + $0x70] sm:$0xff]
    %v649 = vld [vmem:[#allocation5 + $0x78] sm:$0xff]
    %v650 = vld [vmem:[#allocation5 + $0x80] sm:$0x1]
    %652 = vset.pattern.permute.xlu0 0
    %653 = vperm.xlu0 %652, %v631
    %v654 = vpop.permute.xlu0 %653
    %657 = vset.pattern.permute.xlu0 0
    %658 = vperm.xlu0 %657, %v633
    %v659 = vpop.permute.xlu0 %658
    %v661 = vlaneseq
    %v662 = vshrl.u32 %v661, 7
    %v663 = vsub.s32 0, %v662
    %v664 = vrot.slane %v650, %v663
    %v665 = vmul.f32 %v654, %v664
    %v666 = vmul.f32 %v659, %v664
    %667 = vmatprep.subr.mxu0 0.0
    %668 = vmatpush1.msra.mxu0 %v634
    %669 = vmatprep.subr.mxu0 0.0
    %670 = vmatpush1.msra.mxu0 %v635
    %671 = vmatprep.subr.mxu0 0.0
    %672 = vmatpush1.msra.mxu0 %v636
    %673 = vmatprep.subr.mxu0 0.0
    %674 = vmatpush1.msra.mxu0 %v637
    %675 = vmatprep.subr.mxu0 0.0
    %676 = vmatpush1.msra.mxu0 %v638
    %677 = vmatprep.subr.mxu0 0.0
    %678 = vmatpush1.msra.mxu0 %v639
    %679 = vmatprep.subr.mxu0 0.0
    %680 = vmatpush1.msra.mxu0 %v640
    %681 = vmatprep.subr.mxu0 0.0
    %682 = vmatpush1.msra.mxu0 %v641
    %683 = vmatprep.subr.mxu0 0.0
    %684 = vmatpush1.msra.mxu0 %v642
    %685 = vmatprep.subr.mxu0 0.0
    %686 = vmatpush1.msra.mxu0 %v643
    %687 = vmatprep.subr.mxu0 0.0
    %688 = vmatpush1.msra.mxu0 %v644
    %689 = vmatprep.subr.mxu0 0.0
    %690 = vmatpush1.msra.mxu0 %v645
    %691 = vmatprep.subr.mxu0 0.0
    %692 = vmatpush1.msra.mxu0 %v646
    %693 = vmatprep.subr.mxu0 0.0
    %694 = vmatpush1.msra.mxu0 %v647
    %695 = vmatprep.subr.mxu0 0.0
    %696 = vmatpush1.msra.mxu0 %v648
    %697 = vmatprep.subr.mxu0 0.0
    %698 = vmatpush1.msra.mxu0 %v649
    %699 = vmatprep.subr.mxu0 0.0
    %700 = vmatpush1.msra.mxu0 0.0
    %701 = vmatprep.subr.mxu0 0.0
    %702 = vmatpush1.msra.mxu0 0.0
    %703 = vmatprep.subr.mxu0 0.0
    %704 = vmatpush1.msra.mxu0 0.0
    %705 = vmatprep.subr.mxu0 0.0
    %706 = vmatpush1.msra.mxu0 0.0
    %707 = vmatprep.subr.mxu0 0.0
    %708 = vmatpush1.msra.mxu0 0.0
    %709 = vmatprep.subr.mxu0 0.0
    %710 = vmatpush1.msra.mxu0 0.0
    %711 = vmatprep.subr.mxu0 0.0
    %712 = vmatpush1.msra.mxu0 0.0
    %713 = vmatprep.subr.mxu0 0.0
    %714 = vmatpush1.msra.mxu0 0.0
    %715 = vmatprep.subr.mxu0 0.0
    %716 = vmatpush1.msra.mxu0 0.0
    %717 = vmatprep.subr.mxu0 0.0
    %718 = vmatpush1.msra.mxu0 0.0
    %719 = vmatprep.subr.mxu0 0.0
    %720 = vmatpush1.msra.mxu0 0.0
    %721 = vmatprep.subr.mxu0 0.0
    %722 = vmatpush1.msra.mxu0 0.0
    %723 = vmatprep.subr.mxu0 0.0
    %724 = vmatpush1.msra.mxu0 0.0
    %725 = vmatprep.subr.mxu0 0.0
    %726 = vmatpush1.msra.mxu0 0.0
    %727 = vmatprep.subr.mxu0 0.0
    %728 = vmatpush1.msra.mxu0 0.0
    %729 = vmatprep.subr.mxu0 0.0
    %730 = vmatpush1.msra.mxu0 0.0
    %731 = vmatprep.mubr.f32.mxu0 0.0
    %732 = vmatmul.mubr.f32.gmra.mrb[0].mxu0 %v629
    %v733 = vpop.f32.mrb[0].mxu0
    %v734 = vadd.f32 %v665, %v733
    %v735 = vpop.f32.mrb[0].mxu0
    %736 = vmatprep.mubr.f32.mxu0 0.0
    %737 = vmatmul.mubr.f32.gmra.mrb[0].mxu0 %v632
    %v738 = vpop.f32.mrb[0].mxu0
    %v739 = vadd.f32 %v666, %v738
    %v740 = vpop.f32.mrb[0].mxu0
    %741 = vdwg.mxu0
    %742 = vst [vmem:[#allocation7] sm:$0xff] %v734
    %743 = vst [vmem:[#allocation7 + $0x8] sm:$0xf] %v739
    // Predicated region
    $region22: #{tpu_custom_call.1} parent=1 // pred_check
      _
    $region23: #{tpu_custom_call.1} parent=1 // pred_check_branch
      %745 = sbr.rel (0) target = $region25
    $region24: #{tpu_custom_call.1} parent=1 // pred_region
      %s747 = ssub.s32 256, 256
      %748 = vsyncadd [#allocation4], %s747
      %s749 = sshll.u32 [#allocation7], 4
      %s750 = int_to_ptr.vmem [resolvable:$true] %s749
      %755 = dma.vmem_to_hbm [thread:$0]  %s750, 256, %s3, [#allocation4], 128, 128, 8
    $region25: #{tpu_custom_call.1} parent=1 // pred_fallthru
      _
    // Predicated region
    $region26: #{tpu_custom_call.1} parent=1 // pred_check
      _
    $region27: #{tpu_custom_call.1} parent=1 // pred_check_branch
      %757 = sbr.rel (0) target = $region29
    $region28: #{tpu_custom_call.1} parent=1 // pred_region
      %758 = dma.done [#allocation4], 256
    $region29: #{tpu_custom_call.1} parent=1 // pred_fallthru
      _
    %759 = vsyncpa [#allocation3], 1
    %760 = vsyncpa [#allocation6], 1
    %761 = vsyncpa [#allocation4], 1

</llo_original>
